<compile_context>
chip_gen: v6e
topology: v6e:2x2x1
jax: 0.10.0
libtpu: 0.0.40
codegen_flags: <defaults>
</compile_context>

<pallas_src>
import functools

import jax
import jax.numpy as jnp
from jax.experimental import pallas as pl
from jax.experimental.pallas import tpu as pltpu


def _round_up(a, m):
    return ((a + m - 1) // m) * m


def _cdiv(a, b):
    return -(-a // b)


def _tpu_vmem_capacity_bytes():
    try:
        return int(pltpu.get_tpu_info().vmem_capacity_bytes)
    except Exception:
        return 64 * 1024 * 1024  # conservative fallback (v7x per-TC VMEM)


_VMEM_CAP = _tpu_vmem_capacity_bytes()
if _VMEM_CAP >= 128 * 1024 * 1024:
    # v5e / v6e: 128 MiB physical VMEM -> bigger blocks, raised scoped limit.
    _BLOCK_BYTES = 8 << 20
    _VMEM_LIMIT_BYTES = 64 * 1024 * 1024
else:
    # v7x: 64 MiB per TC -> cap blocks at ~4 MiB, keep 32 MiB scoped limit
    # (pass 2 double-buffers in + out: 4 x 4 MiB = 16 MiB << 32 MiB).
    _BLOCK_BYTES = 4 << 20
    _VMEM_LIMIT_BYTES = 32 * 1024 * 1024


def _pick_tile_hw(c, hw, dtype_bytes=4, block_bytes=_BLOCK_BYTES):
    """Lane-dense HW tile: multiple of 128, targeting ~block_bytes per block."""
    budget = max(128, ((block_bytes // max(1, c * dtype_bytes)) // 128) * 128)
    hw128 = _round_up(hw, 128)
    return int(min(hw128, budget))


# ----------------------------- Pallas kernels ------------------------------ #


def _pool_kernel(x_ref, sum_ref, *, hw, tile_hw, tiles_per_part):
    """Accumulate per-channel spatial sums across HW tiles (reduction axis).

    The ragged tail tile (and any phantom tile of the 2-way partition) is
    masked with a column-index compare, so no host-side zero padding is needed.
    Accumulation goes directly into the resident output block.
    """
    t = pl.program_id(2)

    @pl.when(t == 0)
    def _init():
        sum_ref[...] = jnp.zeros_like(sum_ref)

    tile_idx = pl.program_id(1) * tiles_per_part + t
    col = tile_idx * tile_hw + jax.lax.broadcasted_iota(
        jnp.int32, (1, tile_hw), 1)                       # (1, tile_hw)
    x = jnp.where(col < hw, x_ref[0], 0.0)                # (C, tile_hw)
    sum_ref[0, 0] += jnp.sum(x, axis=-1, keepdims=True)   # XLU lane reduce


def _scale_kernel(x_ref, s_ref, o_ref):
    """out tile = x tile * per-channel scale (broadcast over lanes)."""
    o_ref[0] = x_ref[0] * s_ref[0]                        # (C,T) * (C,1)


# -------------------------------- wrapper ---------------------------------- #


@functools.partial(jax.jit, static_argnames=("tile_hw",))
def self_attention_pallas(x, w1, b1, w2, b2, *, tile_hw=None):
    """x: (N, C, H, W) f32. w1: (C//k, C), b1: (C//k,), w2: (C, C//k), b2: (C,)."""
    N, C, H, W = x.shape
    HW = H * W

    if tile_hw is None:
        tile_hw = _pick_tile_hw(C, HW)
    tile_hw = max(128, _round_up(int(tile_hw), 128))
    num_t = _cdiv(HW, tile_hw)
    n_parts = 2 if num_t > 1 else 1          # 2-way split feeds v7x's 2nd core
    tiles_per_part = _cdiv(num_t, n_parts)

    x_flat = x.reshape(N, C, HW)             # contiguous -> metadata only

    # ---- Pass 1: tiled global-average-pool (sum) accumulation ------------- #
    pool = functools.partial(
        _pool_kernel, hw=HW, tile_hw=tile_hw, tiles_per_part=tiles_per_part)

    def _x_pool_map(n, p, t):
        # Clamp phantom tiles (odd num_t split) onto a valid tile; the
        # in-kernel mask zeroes their contribution.
        return (n, 0, jnp.minimum(p * tiles_per_part + t, num_t - 1))

    partials = pl.pallas_call(
        pool,
        out_shape=jax.ShapeDtypeStruct((N, n_parts, C, 1), jnp.float32),
        grid_spec=pltpu.PrefetchScalarGridSpec(
            num_scalar_prefetch=0,
            grid=(N, n_parts, tiles_per_part),
            in_specs=[pl.BlockSpec((1, C, tile_hw), _x_pool_map)],
            out_specs=pl.BlockSpec((1, 1, C, 1), lambda n, p, t: (n, p, 0, 0)),
        ),
        compiler_params=pltpu.CompilerParams(
            dimension_semantics=("parallel", "parallel", "arbitrary"),
            vmem_limit_bytes=_VMEM_LIMIT_BYTES,
        ),
    )(x_flat)

    # ---- Between passes: tiny FCs batched over N in plain XLA ------------- #
    pooled = jnp.sum(partials, axis=1)[:, :, 0] / jnp.float32(HW)   # (N, C)
    h = jnp.maximum(pooled @ w1.T + b1, 0.0)                        # (N, C//k)
    s = jax.nn.sigmoid(h @ w2.T + b2)                               # (N, C)
    s3 = s[..., None].astype(x.dtype)                               # (N, C, 1)

    # ---- Pass 2: tiled, lane-dense channel scale --------------------------- #
    out_flat = pl.pallas_call(
        _scale_kernel,
        out_shape=jax.ShapeDtypeStruct((N, C, HW), x.dtype),
        grid_spec=pltpu.PrefetchScalarGridSpec(
            num_scalar_prefetch=0,
            grid=(N, num_t),
            in_specs=[
                pl.BlockSpec((1, C, tile_hw), lambda n, t: (n, 0, t)),
                pl.BlockSpec((1, C, 1), lambda n, t: (n, 0, 0)),
            ],
            out_specs=pl.BlockSpec((1, C, tile_hw), lambda n, t: (n, 0, t)),
        ),
        compiler_params=pltpu.CompilerParams(
            dimension_semantics=("parallel", "parallel"),
            vmem_limit_bytes=_VMEM_LIMIT_BYTES,
        ),
    )(x_flat, s3)

    return out_flat.reshape(N, C, H, W)


# ------------------------------- reference --------------------------------- #


def _reference(x, w1, b1, w2, b2):
    pooled = jnp.mean(x, axis=(2, 3))                       # (N, C)
    h = jnp.maximum(pooled @ w1.T + b1, 0.0)                # (N, C//k)
    s = jax.nn.sigmoid(h @ w2.T + b2)                       # (N, C)
    return x * s[:, :, None, None]


# ---------------------------------- main ------------------------------------ #


def _make_case(key, N, C, k, H, W):
    Ck = C // k
    kx, k1, k2, k3, k4 = jax.random.split(key, 5)
    x = jax.random.normal(kx, (N, C, H, W), dtype=jnp.float32)
    # PyTorch-like Linear init: U(-1/sqrt(fan_in), 1/sqrt(fan_in)).
    bound1 = 1.0 / (C ** 0.5)
    w1 = jax.random.uniform(k1, (Ck, C), jnp.float32, -bound1, bound1)
    b1 = jax.random.uniform(k2, (Ck,), jnp.float32, -bound1, bound1)
    bound2 = 1.0 / (Ck ** 0.5)
    w2 = jax.random.uniform(k3, (C, Ck), jnp.float32, -bound2, bound2)
    b2 = jax.random.uniform(k4, (C,), jnp.float32, -bound2, bound2)
    return x, w1, b1, w2, b2


if __name__ == "__main__":
    key = jax.random.PRNGKey(0)
    key0, key1 = jax.random.split(key)

    # Case 1: toy shapes (single HW tile path, C not a multiple of 8).
    x, w1, b1, w2, b2 = _make_case(key0, N=2, C=4, k=2, H=16, W=16)
    out = self_attention_pallas(x, w1, b1, w2, b2)
    jax.block_until_ready(out)
    ref = _reference(x, w1, b1, w2, b2)
    assert jnp.allclose(out, ref, atol=1e-5, rtol=1e-5), "case 1 mismatch"

    # Case 2: module-like channels (C=64, k=8) with a ragged spatial size and a
    # forced small tile so the multi-tile accumulation, 2-way partition with a
    # phantom (clamped+masked) tile, and the masked ragged tail are all hit.
    x2, w1_2, b1_2, w2_2, b2_2 = _make_case(key1, N=1, C=64, k=8, H=18, W=18)
    out2 = self_attention_pallas(x2, w1_2, b1_2, w2_2, b2_2, tile_hw=128)
    jax.block_until_ready(out2)
    ref2 = _reference(x2, w1_2, b1_2, w2_2, b2_2)
    assert jnp.allclose(out2, ref2, atol=1e-5, rtol=1e-5), "case 2 mismatch"

    print("KERNEL_OK")
</pallas_src>

<mosaic_0001>
module attributes {stable_mosaic.version = 11 : i64} {
  func.func @_pool_kernel(%arg0: i32, %arg1: i32, %arg2: i32, %arg3: memref<1x4x256xf32, #tpu.memory_space<vmem>>, %arg4: memref<1x1x4x1xf32, #tpu.memory_space<vmem>>) attributes {dimension_semantics = [#tpu.dimension_semantics<parallel>, #tpu.dimension_semantics<parallel>, #tpu.dimension_semantics<arbitrary>], iteration_bounds = array<i64: 2, 1, 1>, scalar_prefetch = 0 : i64, scratch_operands = 0 : i64, tpu.core_type = #tpu.core_type<tc>, window_params = [{transform_indices = @transform_0, window_bounds = array<i64: 1, 4, 256>}, {transform_indices = @transform_1, window_bounds = array<i64: 1, 1, 4, 1>}]} {
    %c0_i32 = arith.constant 0 : i32
    %0 = arith.cmpi eq, %arg2, %c0_i32 : i32
    %1 = arith.extui %0 : i1 to i32
    %c0_i32_0 = arith.constant 0 : i32
    %2 = arith.cmpi ne, %1, %c0_i32_0 : i32
    scf.if %2 {
      %cst_13 = arith.constant 0.000000e+00 : f32
      %25 = vector.broadcast %cst_13 : f32 to vector<1x1x4x1xf32>
      %c0_14 = arith.constant 0 : index
      %c0_15 = arith.constant 0 : index
      %c0_16 = arith.constant 0 : index
      %c0_17 = arith.constant 0 : index
      %26 = vector.load %arg4[%c0_14, %c0_15, %c0_16, %c0_17] : memref<1x1x4x1xf32, #tpu.memory_space<vmem>>, vector<1x1x4x1xf32>
      tpu.vector_store %arg4[%c0_14, %c0_15, %c0_16, %c0_17], %25 {strides = array<i32>} : memref<1x1x4x1xf32, #tpu.memory_space<vmem>>, vector<1x1x4x1xf32>,
    } else {
    }
    %c1_i32 = arith.constant 1 : i32
    %3 = arith.muli %arg1, %c1_i32 : i32
    %4 = arith.addi %3, %arg2 : i32
    %c256_i32 = arith.constant 256 : i32
    %5 = arith.muli %4, %c256_i32 : i32
    %6 = tpu.iota {dimensions = array<i32: 1>} : vector<1x256xi32>
    %7 = vector.broadcast %5 : i32 to vector<1x256xi32>
    %8 = arith.addi %7, %6 : vector<1x256xi32>
    %c256_i32_1 = arith.constant 256 : i32
    %9 = vector.broadcast %c256_i32_1 : i32 to vector<1x256xi32>
    %10 = arith.cmpi slt, %8, %9 : vector<1x256xi32>
    %c0 = arith.constant 0 : index
    %c0_2 = arith.constant 0 : index
    %c0_3 = arith.constant 0 : index
    %11 = vector.load %arg3[%c0, %c0_2, %c0_3] : memref<1x4x256xf32, #tpu.memory_space<vmem>>, vector<1x4x256xf32>
    %12 = vector.shape_cast %11 : vector<1x4x256xf32> to vector<4x256xf32>
    %cst = arith.constant 0.000000e+00 : f32
    %13 = vector.shape_cast %10 : vector<1x256xi1> to vector<1x256xi1>
    %14 = vector.broadcast %13 : vector<1x256xi1> to vector<4x256xi1>
    %15 = vector.broadcast %cst : f32 to vector<4x256xf32>
    %16 = arith.select %14, %12, %15 : vector<4x256xi1>, vector<4x256xf32>
    %c0_4 = arith.constant 0 : index
    %c0_5 = arith.constant 0 : index
    %c0_6 = arith.constant 0 : index
    %c0_7 = arith.constant 0 : index
    %17 = vector.load %arg4[%c0_4, %c0_5, %c0_6, %c0_7] : memref<1x1x4x1xf32, #tpu.memory_space<vmem>>, vector<1x1x4x1xf32>
    %18 = vector.shape_cast %17 : vector<1x1x4x1xf32> to vector<4x1xf32>
    %cst_8 = arith.constant dense<0.000000e+00> : vector<4xf32>
    %19 = vector.multi_reduction <add>, %16, %cst_8 [1] : vector<4x256xf32> to vector<4xf32>
    %20 = vector.shape_cast %19 : vector<4xf32> to vector<4x1xf32>
    %21 = arith.addf %18, %20 : vector<4x1xf32>
    %c0_9 = arith.constant 0 : index
    %c0_10 = arith.constant 0 : index
    %c0_11 = arith.constant 0 : index
    %c0_12 = arith.constant 0 : index
    %22 = vector.load %arg4[%c0_9, %c0_10, %c0_11, %c0_12] : memref<1x1x4x1xf32, #tpu.memory_space<vmem>>, vector<1x1x4x1xf32>
    %23 = vector.shape_cast %22 : vector<1x1x4x1xf32> to vector<4x1xf32>
    %24 = vector.shape_cast %21 : vector<4x1xf32> to vector<1x1x4x1xf32>
    tpu.vector_store %arg4[%c0_9, %c0_10, %c0_11, %c0_12], %24 {strides = array<i32>} : memref<1x1x4x1xf32, #tpu.memory_space<vmem>>, vector<1x1x4x1xf32>,
    return
  }
  func.func @transform_0(%arg0: i32, %arg1: i32, %arg2: i32) -> (i32, i32, i32) {
    %c1_i32 = arith.constant 1 : i32
    %0 = arith.muli %arg1, %c1_i32 : i32
    %1 = arith.addi %0, %arg2 : i32
    %c0_i32 = arith.constant 0 : i32
    %2 = arith.minsi %1, %c0_i32 : i32
    %c0_i32_0 = arith.constant 0 : i32
    %c0_i32_1 = arith.constant 0 : i32
    return %arg0, %c0_i32_0, %2 : i32, i32, i32
  }
  func.func @transform_1(%arg0: i32, %arg1: i32, %arg2: i32) -> (i32, i32, i32, i32) {
    %c0_i32 = arith.constant 0 : i32
    %c0_i32_0 = arith.constant 0 : i32
    %c0_i32_1 = arith.constant 0 : i32
    return %arg0, %arg1, %c0_i32, %c0_i32_0 : i32, i32, i32, i32
  }
}

module attributes {stable_mosaic.version = 11 : i64} {
  func.func @_scale_kernel(%arg0: i32, %arg1: i32, %arg2: memref<1x4x256xf32, #tpu.memory_space<vmem>>, %arg3: memref<1x4x1xf32, #tpu.memory_space<vmem>>, %arg4: memref<1x4x256xf32, #tpu.memory_space<vmem>>) attributes {dimension_semantics = [#tpu.dimension_semantics<parallel>, #tpu.dimension_semantics<parallel>], iteration_bounds = array<i64: 2, 1>, scalar_prefetch = 0 : i64, scratch_operands = 0 : i64, tpu.core_type = #tpu.core_type<tc>, window_params = [{transform_indices = @transform_0, window_bounds = array<i64: 1, 4, 256>}, {transform_indices = @transform_1, window_bounds = array<i64: 1, 4, 1>}, {transform_indices = @transform_2, window_bounds = array<i64: 1, 4, 256>}]} {
    %c0 = arith.constant 0 : index
    %c0_0 = arith.constant 0 : index
    %c0_1 = arith.constant 0 : index
    %0 = vector.load %arg2[%c0, %c0_0, %c0_1] : memref<1x4x256xf32, #tpu.memory_space<vmem>>, vector<1x4x256xf32>
    %1 = vector.shape_cast %0 : vector<1x4x256xf32> to vector<4x256xf32>
    %c0_2 = arith.constant 0 : index
    %c0_3 = arith.constant 0 : index
    %c0_4 = arith.constant 0 : index
    %2 = vector.load %arg3[%c0_2, %c0_3, %c0_4] : memref<1x4x1xf32, #tpu.memory_space<vmem>>, vector<1x4x1xf32>
    %3 = vector.shape_cast %2 : vector<1x4x1xf32> to vector<4x1xf32>
    %4 = vector.broadcast %3 : vector<4x1xf32> to vector<4x256xf32>
    %5 = arith.mulf %1, %4 : vector<4x256xf32>
    %c0_5 = arith.constant 0 : index
    %c0_6 = arith.constant 0 : index
    %c0_7 = arith.constant 0 : index
    %6 = vector.load %arg4[%c0_5, %c0_6, %c0_7] : memref<1x4x256xf32, #tpu.memory_space<vmem>>, vector<1x4x256xf32>
    %7 = vector.shape_cast %6 : vector<1x4x256xf32> to vector<4x256xf32>
    %8 = vector.shape_cast %5 : vector<4x256xf32> to vector<1x4x256xf32>
    tpu.vector_store %arg4[%c0_5, %c0_6, %c0_7], %8 {strides = array<i32>} : memref<1x4x256xf32, #tpu.memory_space<vmem>>, vector<1x4x256xf32>,
    return
  }
  func.func @transform_0(%arg0: i32, %arg1: i32) -> (i32, i32, i32) {
    %c0_i32 = arith.constant 0 : i32
    %c0_i32_0 = arith.constant 0 : i32
    return %arg0, %c0_i32, %arg1 : i32, i32, i32
  }
  func.func @transform_1(%arg0: i32, %arg1: i32) -> (i32, i32, i32) {
    %c0_i32 = arith.constant 0 : i32
    %c0_i32_0 = arith.constant 0 : i32
    %c0_i32_1 = arith.constant 0 : i32
    return %arg0, %c0_i32, %c0_i32_0 : i32, i32, i32
  }
  func.func @transform_2(%arg0: i32, %arg1: i32) -> (i32, i32, i32) {
    %c0_i32 = arith.constant 0 : i32
    %c0_i32_0 = arith.constant 0 : i32
    return %arg0, %c0_i32, %arg1 : i32, i32, i32
  }
}

</mosaic_0001>

<llo_original>
// kernel: self_attention_pallas.2
$region0: #{self_attention_pallas.2}
  #allocation0 [shape = 'u32[]', space=smem, size = 0x4, offset = 0x4, fixed_abs, tag = 'smem constant byte address 0x4 - core index']
  #allocation1 [shape = 'u32[144,128]{1,0:T(1,128)}', space=vmem, size = 0x12000, scoped, tag = 'internal scratch']
  %s0 = inlined_call_operand.vmem [shape: f32[2,4,256], index: 0, kind: input, shape index: {}]
  %s1 = inlined_call_operand.vmem [shape: f32[2,1,4,1], index: 1, kind: output, shape index: {}]
  %s2 = sld [smem:[#allocation0]]
  $region41: #{self_attention_pallas.2} parent=0
    _
  %s4 = ssub.s32 1, %s2
  %s5 = scalar_select 0, %s4, %s2
  loop: start=0, step=1, limit=4
  $region2: #{self_attention_pallas.2} parent=0 // loop_pre_header
    _
  $region3: #{self_attention_pallas.2} parent=0 // loop_header
    %s7 = sphi 0, %s11
    %p8 = scmp.ge.s32.totalorder %s7, 4
    %s14 = sphi 0, %s33
    %s15 = sphi 0, %s29
    %s16 = sphi 0, %s25
    %s17 = sphi 0, %s14
    %s18 = sphi 0, %s15
    %s19 = sphi 0, %s16
    %s20 = sphi 0, %s17
    %s21 = sphi 0, %s18
    %s22 = sphi 0, %s19
    %s44 = sphi 0, %s46
    %s47 = sphi 0, %s44
    %s48 = sphi 0, %s47
    %s64 = sphi 0, %s48
    %s72 = sphi 0, %s74
    %s75 = sphi 0, %s72
    %s76 = sphi 0, %s75
    %s92 = sphi 0, %s76
  $region4: #{self_attention_pallas.2} parent=0 // loop_header_branch
    %10 = sbr.rel (%p8) target = $region8
  $region5: #{self_attention_pallas.2} parent=0 // loop_body
    %s12 = ssub.s32 %s7, 1
    %s13 = ssub.s32 %s7, 2
    %s23 = sadd.s32 1, %s16
    %p24 = scmp.ge.s32.totalorder %s23, 1
    %s25 = scalar_select %p24, 0, %s23
    %s26 = sadd.s32 1, %s15
    %s27 = scalar_select %p24, %s26, %s15
    %p28 = scmp.ge.s32.totalorder %s27, 1
    %s29 = scalar_select %p28, 0, %s27
    %s30 = sadd.s32 1, %s14
    %s31 = scalar_select %p28, %s30, %s14
    %p32 = scmp.ge.s32.totalorder %s31, 2
    %s33 = scalar_select %p32, 0, %s31
    %s34 = sadd.s32 %s15, %s16
    %p35 = scmp.lt.s32.totalorder %s34, 0
    %s36 = scalar_select %p35, %s34, 0
    %s37 = sadd.s32 %s29, %s25
    %p38 = scmp.lt.s32.totalorder %s37, 0
    %s39 = scalar_select %p38, %s37, 0
    %s40 = ssub.s32 %s14, %s33
    %s41 = ssub.s32 %s36, %s39
    %s42 = sor.u32 %s40, %s41
    %p43 = scmp.eq.s32.totalorder %s42, 0
    %s45 = sadd.s32 %s44, 1
    %s46 = scalar_select %p43, %s44, %s45
    %p49 = pneg %p43
    %p50 = scmp.eq.s32.totalorder %s7, 1
    %p51 = por %p49, %p50
    %p52 = scmp.ne.s32.totalorder %s44, %s47
    %p53 = scmp.eq.s32.totalorder %s7, 0
    %p54 = por %p52, %p53
    %p55 = scmp.ne.s32.totalorder %s44, %s47
    %p56 = scmp.eq.s32.totalorder %s12, 1
    %p57 = por %p55, %p56
    %p58 = scmp.ne.s32.totalorder %s47, %s48
    %p59 = scmp.eq.s32.totalorder %s12, 0
    %p60 = por %p58, %p59
    %p61 = scmp.ne.s32.totalorder %s47, %s48
    %p62 = scmp.eq.s32.totalorder %s13, 1
    %p63 = por %p61, %p62
    %p65 = scmp.ne.s32.totalorder %s48, %s64
    %p66 = scmp.eq.s32.totalorder %s13, 0
    %p67 = por %p65, %p66
    %s68 = ssub.s32 %s14, %s33
    %s69 = ssub.s32 %s15, %s29
    %s70 = sor.u32 %s68, %s69
    %p71 = scmp.eq.s32.totalorder %s70, 0
    %s73 = sadd.s32 %s72, 1
    %s74 = scalar_select %p71, %s72, %s73
    %p77 = pneg %p71
    %p78 = scmp.eq.s32.totalorder %s7, 1
    %p79 = por %p77, %p78
    %p80 = scmp.ne.s32.totalorder %s72, %s75
    %p81 = scmp.eq.s32.totalorder %s7, 0
    %p82 = por %p80, %p81
    %p83 = scmp.ne.s32.totalorder %s72, %s75
    %p84 = scmp.eq.s32.totalorder %s12, 1
    %p85 = por %p83, %p84
    %p86 = scmp.ne.s32.totalorder %s75, %s76
    %p87 = scmp.eq.s32.totalorder %s12, 0
    %p88 = por %p86, %p87
    %p89 = scmp.ne.s32.totalorder %s75, %s76
    %p90 = scmp.eq.s32.totalorder %s13, 1
    %p91 = por %p89, %p90
    %p93 = scmp.ne.s32.totalorder %s76, %s92
    %p94 = scmp.eq.s32.totalorder %s13, 0
    %p95 = por %p93, %p94
    %p96 = scmp.le.s32.totalorder 1, %s7
    %p97 = scmp.lt.s32.totalorder %s7, 3
    %p98 = pnand %p96, %p97
    %p99 = pneg %p98
    // Predicated region
    $region9: #{self_attention_pallas.2} parent=5 // pred_check
      _
    $region10: #{self_attention_pallas.2} parent=5 // pred_check_branch
      %101 = sbr.rel (%p98) target = $region12
    $region11: #{self_attention_pallas.2} parent=5 // pred_region
      %s102 = ssub.s32 %s7, 1
    $region12: #{self_attention_pallas.2} parent=5 // pred_fallthru
      _
    %p103 = scmp.lt.s32.totalorder %s7, 2
    // Predicated region
    $region13: #{self_attention_pallas.2} parent=5 // pred_check
      %p104 = pneg %p103
    $region14: #{self_attention_pallas.2} parent=5 // pred_check_branch
      %106 = sbr.rel (%p104) target = $region16
    $region15: #{self_attention_pallas.2} parent=5 // pred_region
      // Predicated region
      $region17: #{self_attention_pallas.2} parent=15 // pred_check
        %p107 = pneg %p54
      $region18: #{self_attention_pallas.2} parent=15 // pred_check_branch
        %109 = sbr.rel (%p107) target = $region20
      $region19: #{self_attention_pallas.2} parent=15 // pred_region
        %s110 = sadd.s32 %s15, %s16
        %p111 = scmp.lt.s32.totalorder %s110, 0
        %s112 = scalar_select %p111, %s110, 0
        %s113 = smul.u32 2, %s112
        %p114 = scmp.lt.s32.totalorder %s14, 1
        %s115 = scalar_select %p114, %s14, 1
        %p116 = scmp.lt.s32.totalorder %s113, 1
        %s117 = scalar_select %p116, %s113, 1
        %s118 = smul.addr %s115, 2
        %s119 = sadd.s32 %s117, %s118
        %s120 = smul.addr %s119, 4
        %s121 = scalar_lea.vmem %s0, %s120
        %s122 = sadd.s32 %s15, %s16
        %p123 = scmp.lt.s32.totalorder %s122, 0
        %s124 = scalar_select %p123, %s122, 0
        %s125 = smul.u32 2, %s124
      $region20: #{self_attention_pallas.2} parent=15 // pred_fallthru
        _
    $region16: #{self_attention_pallas.2} parent=5 // pred_fallthru
      _
    %p126 = scmp.le.s32.totalorder 1, %s7
    %p127 = scmp.lt.s32.totalorder %s7, 3
    %p128 = pnand %p126, %p127
    %p129 = pneg %p128
    // Predicated region
    $region21: #{self_attention_pallas.2} parent=5 // pred_check
      _
    $region22: #{self_attention_pallas.2} parent=5 // pred_check_branch
      %131 = sbr.rel (%p128) target = $region24
    $region23: #{self_attention_pallas.2} parent=5 // pred_region
      %s132 = ssub.s32 %s7, 1
      %s133 = sadd.s32 %s18, %s19
      %p134 = scmp.lt.s32.totalorder %s133, 0
      %s135 = scalar_select %p134, %s133, 0
      %s136 = smul.u32 2, %s135
      %p137 = scmp.lt.s32.totalorder %s17, 1
      %s138 = scalar_select %p137, %s17, 1
      %p139 = scmp.lt.s32.totalorder %s136, 1
      %s140 = scalar_select %p139, %s136, 1
      %s141 = smul.addr %s138, 2
      %s142 = sadd.s32 %s140, %s141
      %s143 = smul.addr %s142, 4
      %s144 = scalar_lea.vmem %s0, %s143
      %p145 = pneg %p60
      %p146 = pneg %p57
      %p147 = pneg %p88
      %p148 = pneg %p85
      %p149 = scmp.lt.s32.totalorder %s17, 1
      %s150 = scalar_select %p149, %s17, 1
      %p151 = scmp.lt.s32.totalorder %s18, 0
      %s152 = scalar_select %p151, %s18, 0
      %s153 = sadd.s32 %s152, %s150
      %s154 = smul.addr %s153, 4
      %s155 = scalar_lea.vmem %s1, %s154
      %s156 = sadd.s32 %s18, %s19
      %p157 = scmp.lt.s32.totalorder %s156, 0
      %s158 = scalar_select %p157, %s156, 0
      %s159 = smul.u32 2, %s158
      %p160 = scmp.lt.s32.totalorder %s17, 1
      %s161 = scalar_select %p160, %s17, 1
      %p162 = scmp.lt.s32.totalorder %s159, 1
      %s163 = scalar_select %p162, %s159, 1
      %s164 = smul.addr %s161, 2
      %s165 = sadd.s32 %s163, %s164
      %s166 = smul.addr %s165, 4
      %s167 = scalar_lea.vmem %s0, %s166
      %s168 = sadd.s32 %s18, %s19
      %p169 = scmp.lt.s32.totalorder %s168, 0
      %s170 = scalar_select %p169, %s168, 0
      %s171 = smul.u32 2, %s170
      %p172 = scmp.lt.s32.totalorder %s17, 1
      %s173 = scalar_select %p172, %s17, 1
      %p174 = scmp.lt.s32.totalorder %s18, 0
      %s175 = scalar_select %p174, %s18, 0
      %s176 = sadd.s32 %s175, %s173
      %s177 = smul.addr %s176, 4
      %s178 = scalar_lea.vmem %s1, %s177
      %p179 = scmp.eq.s32.totalorder %s19, 0
      // Predicated region
      $region25: #{self_attention_pallas.2} parent=23 // pred_check
        %p180 = pneg %p179
      $region26: #{self_attention_pallas.2} parent=23 // pred_check_branch
        %182 = sbr.rel (%p180) target = $region28
      $region27: #{self_attention_pallas.2} parent=23 // pred_region
        %vm183 = vcmask 3072
        %184 = vst.msk [vmem:[%s178] sm:$0xf] %vm183, 0.0
      $region28: #{self_attention_pallas.2} parent=23 // pred_fallthru
        _
      %s185 = sadd.s32 %s18, %s19
      %s186 = smul.u32 %s185, 256
      %v187 = vlaneseq
      %v188 = vand.u32 %v187, 127
      %v189 = vadd.s32 %v188, 128
      %v190 = vstv %s186
      %v191 = vadd.s32 %v190, %v188
      %v192 = vadd.s32 %v190, %v189
      %vm193 = vcmp.lt.s32.totalorder %v191, 256
      %vm194 = vcmp.lt.s32.totalorder %v192, 256
      %v195 = vld [vmem:[%s167] sm:$0xff]
      %v196 = vsel %vm193, 1, 0
      %v197 = vsel %vm194, 1, 0
      %vm198 = vcmp.eq.s32.totalorder %v196, 1
      %vm199 = vcmp.eq.s32.totalorder %v197, 1
      %v201 = vcombine.high %v195, %v195
      %v203 = vsel %vm198, %v195, 0.0
      %v204 = vsel %vm199, %v201, 0.0
      %v205 = vld [vmem:[%s178] sm:$0xf]
      %vm206 = vcmask 1043456
      %v207 = vsel %vm206, %v203, 0.0
      %v208 = vsel %vm206, %v204, 0.0
      %v209 = vadd.f32 %v207, %v208
      %210 = vadd.xlane.f32.xlu0 %v209
      %v211 = vpop.xlane.xlu0 %210
      %v212 = vadd.f32 %v205, %v211
      %vm213 = vcmask 3072
      %214 = vst.msk [vmem:[%s178] sm:$0xf] %vm213, %v212
      %p215 = scmp.lt.s32.totalorder %s17, 1
      %s216 = scalar_select %p215, %s17, 1
      %p217 = scmp.lt.s32.totalorder %s18, 0
      %s218 = scalar_select %p217, %s18, 0
      %s219 = sadd.s32 %s218, %s216
      %s220 = smul.addr %s219, 4
      %s221 = scalar_lea.vmem %s1, %s220
      // Predicated region
      $region29: #{self_attention_pallas.2} parent=23 // pred_check
        %p222 = pneg %p85
      $region30: #{self_attention_pallas.2} parent=23 // pred_check_branch
        %224 = sbr.rel (%p222) target = $region32
      $region31: #{self_attention_pallas.2} parent=23 // pred_region
        _
      $region32: #{self_attention_pallas.2} parent=23 // pred_fallthru
        _
    $region24: #{self_attention_pallas.2} parent=5 // pred_fallthru
      _
    %p225 = scmp.le.s32.totalorder 2, %s7
    // Predicated region
    $region33: #{self_attention_pallas.2} parent=5 // pred_check
      %p226 = pneg %p225
    $region34: #{self_attention_pallas.2} parent=5 // pred_check_branch
      %228 = sbr.rel (%p226) target = $region36
    $region35: #{self_attention_pallas.2} parent=5 // pred_region
      %s229 = ssub.s32 %s7, 2
      // Predicated region
      $region37: #{self_attention_pallas.2} parent=35 // pred_check
        %p230 = pneg %p91
      $region38: #{self_attention_pallas.2} parent=35 // pred_check_branch
        %232 = sbr.rel (%p230) target = $region40
      $region39: #{self_attention_pallas.2} parent=35 // pred_region
        %p233 = scmp.lt.s32.totalorder %s20, 1
        %s234 = scalar_select %p233, %s20, 1
        %p235 = scmp.lt.s32.totalorder %s21, 0
        %s236 = scalar_select %p235, %s21, 0
        %s237 = sadd.s32 %s236, %s234
        %s238 = smul.addr %s237, 4
        %s239 = scalar_lea.vmem %s1, %s238
      $region40: #{self_attention_pallas.2} parent=35 // pred_fallthru
        _
    $region36: #{self_attention_pallas.2} parent=5 // pred_fallthru
      _
  $region6: #{self_attention_pallas.2} parent=0 // loop_footer
    %s11 = sadd.s32 1, %s7
  $region7: #{self_attention_pallas.2} parent=0 // loop_footer_branch
    %6 = sbr.rel target = $region3
  $region8: #{self_attention_pallas.2} parent=0 // loop_exit
    _

// kernel: self_attention_pallas.3
$region0: #{self_attention_pallas.3}
  #allocation0 [shape = 'u32[]', space=smem, size = 0x4, offset = 0x4, fixed_abs, tag = 'smem constant byte address 0x4 - core index']
  #allocation1 [shape = 'u32[144,128]{1,0:T(1,128)}', space=vmem, size = 0x12000, scoped, tag = 'internal scratch']
  %s0 = inlined_call_operand.vmem [shape: f32[2,4,256], index: 0, kind: input, shape index: {}]
  %s1 = inlined_call_operand.vmem [shape: f32[2,4,1], index: 1, kind: input, shape index: {}]
  %s2 = inlined_call_operand.vmem [shape: f32[2,4,256], index: 2, kind: output, shape index: {}]
  %s3 = sld [smem:[#allocation0]]
  $region41: #{self_attention_pallas.3} parent=0
    _
  %s5 = ssub.s32 1, %s3
  %s6 = scalar_select 0, %s5, %s3
  loop: start=0, step=1, limit=4
  $region2: #{self_attention_pallas.3} parent=0 // loop_pre_header
    _
  $region3: #{self_attention_pallas.3} parent=0 // loop_header
    %s8 = sphi 0, %s12
    %p9 = scmp.ge.s32.totalorder %s8, 4
    %s15 = sphi 0, %s27
    %s16 = sphi 0, %s23
    %s17 = sphi 0, %s15
    %s18 = sphi 0, %s16
    %s19 = sphi 0, %s17
    %s20 = sphi 0, %s18
    %s32 = sphi 0, %s34
    %s35 = sphi 0, %s32
    %s36 = sphi 0, %s35
    %s52 = sphi 0, %s36
    %s58 = sphi 0, %s60
    %s61 = sphi 0, %s58
    %s62 = sphi 0, %s61
    %s78 = sphi 0, %s62
    %s86 = sphi 0, %s88
    %s89 = sphi 0, %s86
    %s90 = sphi 0, %s89
    %s106 = sphi 0, %s90
  $region4: #{self_attention_pallas.3} parent=0 // loop_header_branch
    %11 = sbr.rel (%p9) target = $region8
  $region5: #{self_attention_pallas.3} parent=0 // loop_body
    %s13 = ssub.s32 %s8, 1
    %s14 = ssub.s32 %s8, 2
    %s21 = sadd.s32 1, %s16
    %p22 = scmp.ge.s32.totalorder %s21, 1
    %s23 = scalar_select %p22, 0, %s21
    %s24 = sadd.s32 1, %s15
    %s25 = scalar_select %p22, %s24, %s15
    %p26 = scmp.ge.s32.totalorder %s25, 2
    %s27 = scalar_select %p26, 0, %s25
    %s28 = ssub.s32 %s15, %s27
    %s29 = ssub.s32 %s16, %s23
    %s30 = sor.u32 %s28, %s29
    %p31 = scmp.eq.s32.totalorder %s30, 0
    %s33 = sadd.s32 %s32, 1
    %s34 = scalar_select %p31, %s32, %s33
    %p37 = pneg %p31
    %p38 = scmp.eq.s32.totalorder %s8, 1
    %p39 = por %p37, %p38
    %p40 = scmp.ne.s32.totalorder %s32, %s35
    %p41 = scmp.eq.s32.totalorder %s8, 0
    %p42 = por %p40, %p41
    %p43 = scmp.ne.s32.totalorder %s32, %s35
    %p44 = scmp.eq.s32.totalorder %s13, 1
    %p45 = por %p43, %p44
    %p46 = scmp.ne.s32.totalorder %s35, %s36
    %p47 = scmp.eq.s32.totalorder %s13, 0
    %p48 = por %p46, %p47
    %p49 = scmp.ne.s32.totalorder %s35, %s36
    %p50 = scmp.eq.s32.totalorder %s14, 1
    %p51 = por %p49, %p50
    %p53 = scmp.ne.s32.totalorder %s36, %s52
    %p54 = scmp.eq.s32.totalorder %s14, 0
    %p55 = por %p53, %p54
    %s56 = ssub.s32 %s15, %s27
    %p57 = scmp.eq.s32.totalorder %s56, 0
    %s59 = sadd.s32 %s58, 1
    %s60 = scalar_select %p57, %s58, %s59
    %p63 = pneg %p57
    %p64 = scmp.eq.s32.totalorder %s8, 1
    %p65 = por %p63, %p64
    %p66 = scmp.ne.s32.totalorder %s58, %s61
    %p67 = scmp.eq.s32.totalorder %s8, 0
    %p68 = por %p66, %p67
    %p69 = scmp.ne.s32.totalorder %s58, %s61
    %p70 = scmp.eq.s32.totalorder %s13, 1
    %p71 = por %p69, %p70
    %p72 = scmp.ne.s32.totalorder %s61, %s62
    %p73 = scmp.eq.s32.totalorder %s13, 0
    %p74 = por %p72, %p73
    %p75 = scmp.ne.s32.totalorder %s61, %s62
    %p76 = scmp.eq.s32.totalorder %s14, 1
    %p77 = por %p75, %p76
    %p79 = scmp.ne.s32.totalorder %s62, %s78
    %p80 = scmp.eq.s32.totalorder %s14, 0
    %p81 = por %p79, %p80
    %s82 = ssub.s32 %s15, %s27
    %s83 = ssub.s32 %s16, %s23
    %s84 = sor.u32 %s82, %s83
    %p85 = scmp.eq.s32.totalorder %s84, 0
    %s87 = sadd.s32 %s86, 1
    %s88 = scalar_select %p85, %s86, %s87
    %p91 = pneg %p85
    %p92 = scmp.eq.s32.totalorder %s8, 1
    %p93 = por %p91, %p92
    %p94 = scmp.ne.s32.totalorder %s86, %s89
    %p95 = scmp.eq.s32.totalorder %s8, 0
    %p96 = por %p94, %p95
    %p97 = scmp.ne.s32.totalorder %s86, %s89
    %p98 = scmp.eq.s32.totalorder %s13, 1
    %p99 = por %p97, %p98
    %p100 = scmp.ne.s32.totalorder %s89, %s90
    %p101 = scmp.eq.s32.totalorder %s13, 0
    %p102 = por %p100, %p101
    %p103 = scmp.ne.s32.totalorder %s89, %s90
    %p104 = scmp.eq.s32.totalorder %s14, 1
    %p105 = por %p103, %p104
    %p107 = scmp.ne.s32.totalorder %s90, %s106
    %p108 = scmp.eq.s32.totalorder %s14, 0
    %p109 = por %p107, %p108
    %p110 = scmp.le.s32.totalorder 1, %s8
    %p111 = scmp.lt.s32.totalorder %s8, 3
    %p112 = pnand %p110, %p111
    %p113 = pneg %p112
    // Predicated region
    $region9: #{self_attention_pallas.3} parent=5 // pred_check
      _
    $region10: #{self_attention_pallas.3} parent=5 // pred_check_branch
      %115 = sbr.rel (%p112) target = $region12
    $region11: #{self_attention_pallas.3} parent=5 // pred_region
      %s116 = ssub.s32 %s8, 1
    $region12: #{self_attention_pallas.3} parent=5 // pred_fallthru
      _
    %p117 = scmp.lt.s32.totalorder %s8, 2
    // Predicated region
    $region13: #{self_attention_pallas.3} parent=5 // pred_check
      %p118 = pneg %p117
    $region14: #{self_attention_pallas.3} parent=5 // pred_check_branch
      %120 = sbr.rel (%p118) target = $region16
    $region15: #{self_attention_pallas.3} parent=5 // pred_region
      // Predicated region
      $region17: #{self_attention_pallas.3} parent=15 // pred_check
        %p121 = pneg %p42
      $region18: #{self_attention_pallas.3} parent=15 // pred_check_branch
        %123 = sbr.rel (%p121) target = $region20
      $region19: #{self_attention_pallas.3} parent=15 // pred_region
        %s124 = smul.u32 2, %s16
        %p125 = scmp.lt.s32.totalorder %s15, 1
        %s126 = scalar_select %p125, %s15, 1
        %p127 = scmp.lt.s32.totalorder %s124, 1
        %s128 = scalar_select %p127, %s124, 1
        %s129 = smul.addr %s126, 2
        %s130 = sadd.s32 %s128, %s129
        %s131 = smul.addr %s130, 4
        %s132 = scalar_lea.vmem %s0, %s131
        %s133 = smul.u32 2, %s16
      $region20: #{self_attention_pallas.3} parent=15 // pred_fallthru
        _
      // Predicated region
      $region21: #{self_attention_pallas.3} parent=15 // pred_check
        %p134 = pneg %p68
      $region22: #{self_attention_pallas.3} parent=15 // pred_check_branch
        %136 = sbr.rel (%p134) target = $region24
      $region23: #{self_attention_pallas.3} parent=15 // pred_region
        %p137 = scmp.lt.s32.totalorder %s15, 1
        %s138 = scalar_select %p137, %s15, 1
        %s139 = smul.addr %s138, 4
        %s140 = scalar_lea.vmem %s1, %s139
      $region24: #{self_attention_pallas.3} parent=15 // pred_fallthru
        _
    $region16: #{self_attention_pallas.3} parent=5 // pred_fallthru
      _
    %p141 = scmp.le.s32.totalorder 1, %s8
    %p142 = scmp.lt.s32.totalorder %s8, 3
    %p143 = pnand %p141, %p142
    %p144 = pneg %p143
    // Predicated region
    $region25: #{self_attention_pallas.3} parent=5 // pred_check
      _
    $region26: #{self_attention_pallas.3} parent=5 // pred_check_branch
      %146 = sbr.rel (%p143) target = $region28
    $region27: #{self_attention_pallas.3} parent=5 // pred_region
      %s147 = ssub.s32 %s8, 1
      %s148 = smul.u32 2, %s18
      %p149 = scmp.lt.s32.totalorder %s17, 1
      %s150 = scalar_select %p149, %s17, 1
      %p151 = scmp.lt.s32.totalorder %s148, 1
      %s152 = scalar_select %p151, %s148, 1
      %s153 = smul.addr %s150, 2
      %s154 = sadd.s32 %s152, %s153
      %s155 = smul.addr %s154, 4
      %s156 = scalar_lea.vmem %s0, %s155
      %p157 = pneg %p48
      %p158 = pneg %p45
      %p159 = scmp.lt.s32.totalorder %s17, 1
      %s160 = scalar_select %p159, %s17, 1
      %s161 = smul.addr %s160, 4
      %s162 = scalar_lea.vmem %s1, %s161
      %p163 = pneg %p74
      %p164 = pneg %p71
      %p165 = pneg %p102
      %p166 = pneg %p99
      %s167 = smul.u32 2, %s18
      %p168 = scmp.lt.s32.totalorder %s17, 1
      %s169 = scalar_select %p168, %s17, 1
      %p170 = scmp.lt.s32.totalorder %s167, 1
      %s171 = scalar_select %p170, %s167, 1
      %s172 = smul.addr %s169, 2
      %s173 = sadd.s32 %s171, %s172
      %s174 = smul.addr %s173, 4
      %s175 = scalar_lea.vmem %s2, %s174
      %s176 = smul.u32 2, %s18
      %p177 = scmp.lt.s32.totalorder %s17, 1
      %s178 = scalar_select %p177, %s17, 1
      %p179 = scmp.lt.s32.totalorder %s176, 1
      %s180 = scalar_select %p179, %s176, 1
      %s181 = smul.addr %s178, 2
      %s182 = sadd.s32 %s180, %s181
      %s183 = smul.addr %s182, 4
      %s184 = scalar_lea.vmem %s0, %s183
      %s185 = smul.u32 2, %s18
      %p186 = scmp.lt.s32.totalorder %s17, 1
      %s187 = scalar_select %p186, %s17, 1
      %s188 = smul.addr %s187, 4
      %s189 = scalar_lea.vmem %s1, %s188
      %s190 = smul.u32 2, %s18
      %p191 = scmp.lt.s32.totalorder %s17, 1
      %s192 = scalar_select %p191, %s17, 1
      %p193 = scmp.lt.s32.totalorder %s190, 1
      %s194 = scalar_select %p193, %s190, 1
      %s195 = smul.addr %s192, 2
      %s196 = sadd.s32 %s194, %s195
      %s197 = smul.addr %s196, 4
      %s198 = scalar_lea.vmem %s2, %s197
      %s199 = smul.u32 2, %s18
      %v200 = vld [vmem:[%s184] sm:$0xff]
      %v201 = vld [vmem:[%s189] sm:$0xf]
      %203 = vset.pattern.permute.xlu0 0
      %204 = vperm.xlu0 %203, %v201
      %v205 = vpop.permute.xlu0 %204
      %v207 = vunpack.c.l.s4 839922192
      %v208 = vunpack.c.0.s8 %v207
      %v209 = vlaneseq
      %v210 = vshrl.u32 %v209, 7
      %v211 = vsub.s32 %v208, %v210
      %v212 = vrot.slane %v205, %v211
      %v214 = vmul.f32 %v200, %v212
      %215 = vst [vmem:[%s198] sm:$0xff] %v214
      %s216 = smul.u32 2, %s18
      %p217 = scmp.lt.s32.totalorder %s17, 1
      %s218 = scalar_select %p217, %s17, 1
      %p219 = scmp.lt.s32.totalorder %s216, 1
      %s220 = scalar_select %p219, %s216, 1
      %s221 = smul.addr %s218, 2
      %s222 = sadd.s32 %s220, %s221
      %s223 = smul.addr %s222, 4
      %s224 = scalar_lea.vmem %s2, %s223
      // Predicated region
      $region29: #{self_attention_pallas.3} parent=27 // pred_check
        %p225 = pneg %p99
      $region30: #{self_attention_pallas.3} parent=27 // pred_check_branch
        %227 = sbr.rel (%p225) target = $region32
      $region31: #{self_attention_pallas.3} parent=27 // pred_region
        %s228 = smul.u32 2, %s18
      $region32: #{self_attention_pallas.3} parent=27 // pred_fallthru
        _
    $region28: #{self_attention_pallas.3} parent=5 // pred_fallthru
      _
    %p229 = scmp.le.s32.totalorder 2, %s8
    // Predicated region
    $region33: #{self_attention_pallas.3} parent=5 // pred_check
      %p230 = pneg %p229
    $region34: #{self_attention_pallas.3} parent=5 // pred_check_branch
      %232 = sbr.rel (%p230) target = $region36
    $region35: #{self_attention_pallas.3} parent=5 // pred_region
      %s233 = ssub.s32 %s8, 2
      // Predicated region
      $region37: #{self_attention_pallas.3} parent=35 // pred_check
        %p234 = pneg %p105
      $region38: #{self_attention_pallas.3} parent=35 // pred_check_branch
        %236 = sbr.rel (%p234) target = $region40
      $region39: #{self_attention_pallas.3} parent=35 // pred_region
        %s237 = smul.u32 2, %s20
        %p238 = scmp.lt.s32.totalorder %s19, 1
        %s239 = scalar_select %p238, %s19, 1
        %p240 = scmp.lt.s32.totalorder %s237, 1
        %s241 = scalar_select %p240, %s237, 1
        %s242 = smul.addr %s239, 2
        %s243 = sadd.s32 %s241, %s242
        %s244 = smul.addr %s243, 4
        %s245 = scalar_lea.vmem %s2, %s244
      $region40: #{self_attention_pallas.3} parent=35 // pred_fallthru
        _
    $region36: #{self_attention_pallas.3} parent=5 // pred_fallthru
      _
  $region6: #{self_attention_pallas.3} parent=0 // loop_footer
    %s12 = sadd.s32 1, %s8
  $region7: #{self_attention_pallas.3} parent=0 // loop_footer_branch
    %7 = sbr.rel target = $region3
  $region8: #{self_attention_pallas.3} parent=0 // loop_exit
    _

</llo_original>
